<compile_context>
chip_gen: v5e
topology: v5e:2x2
jax: 0.10.0
libtpu: 0.0.40
codegen_flags: <defaults>
</compile_context>

<pallas_src>
import jax
import jax.numpy as jnp
from jax.experimental import pallas as pl
from jax.experimental.pallas import tpu as pltpu

# ----- model hyper-parameters (synthetic, small) -----
B = 2            # batch
C = 4            # image channels
H = W = 16       # spatial
HW = H * W       # 256
BHW = B * HW     # 512 -> lane axis
HIDDEN = 32      # hidden channels
NUM_DOMAINS = 4
STYLE_DIM = 8

_VMEM = pl.BlockSpec(memory_space=pltpu.MemorySpace.VMEM)
_SMEM = pl.BlockSpec(memory_space=pltpu.MemorySpace.SMEM)


# ---------------- fused Pallas kernel ----------------

def _cycle_loss_kernel(x_cat_ref, y_exp_ref, sel_ref, avg_ref, expand_ref,
                       blk_w_ref, blk_b_ref,
                       enc_fc_wT_ref, enc_fc_b_ref,
                       gen_style_wT_ref, gen_style_b_ref,
                       conv2_wT_ref, conv2_b_ref,
                       o_ref):
    x_cat = x_cat_ref[...]                 # (2C, B*HW) f32: [x_real ; x_fake]
    xr = x_cat[:C, :]                      # (C, B*HW)  x_real (for exact L1)

    # enc_conv(x_real) and gen_conv1(x_fake) fused via block-diag weight:
    # one (2H, 2C) @ (2C, B*HW) matmul, both batches at once on the lane axis.
    feats = jnp.dot(blk_w_ref[...], x_cat,
                    preferred_element_type=jnp.float32) + blk_b_ref[...]
    feats = jnp.maximum(feats, 0.0)        # ReLU, (2*HIDDEN, B*HW)
    enc_feat = feats[:HIDDEN, :]           # (HIDDEN, B*HW)
    g1 = feats[HIDDEN:, :]                 # (HIDDEN, B*HW)

    # StyleEncoder tail: per-batch GAP as a matmul -> FC -> select-by-domain.
    pooled = jnp.dot(enc_feat, avg_ref[...],
                     preferred_element_type=jnp.float32)            # (HIDDEN, B)
    styles = jnp.dot(enc_fc_wT_ref[...], pooled,
                     preferred_element_type=jnp.float32) + enc_fc_b_ref[...]
    s_x = jnp.dot(sel_ref[...], styles * y_exp_ref[...],
                  preferred_element_type=jnp.float32)                # (S, B)

    # Generator: style FC -> per-batch AdaIN modulation -> 1x1 conv back to C.
    gb = jnp.dot(gen_style_wT_ref[...], s_x,
                 preferred_element_type=jnp.float32) + gen_style_b_ref[...]  # (2H, B)
    gbe = jnp.dot(gb, expand_ref[...],
                  preferred_element_type=jnp.float32)                # (2H, B*HW)
    gamma = gbe[:HIDDEN, :]
    beta = gbe[HIDDEN:, :]
    mod = g1 * (1.0 + gamma) + beta                                  # (HIDDEN, B*HW)
    x_recon = jnp.dot(conv2_wT_ref[...], mod,
                      preferred_element_type=jnp.float32) + conv2_b_ref[...]  # (C, B*HW)

    # L1 loss (mean over all elements).
    o_ref[0, 0] = jnp.sum(jnp.abs(xr - x_recon)) / jnp.float32(B * C * HW)


# ---------------- parameters (deterministic synthetic init) ----------------

def make_params():
    keys = jax.random.split(jax.random.PRNGKey(42), 5)

    def init(k, shape, scale=0.1):
        return scale * jax.random.normal(k, shape, dtype=jnp.float32)

    return dict(
        enc_conv_w=init(keys[0], (C, HIDDEN)),
        enc_conv_b=jnp.zeros((HIDDEN,), jnp.float32),
        enc_fc_w=init(keys[1], (HIDDEN, NUM_DOMAINS * STYLE_DIM)),
        enc_fc_b=jnp.zeros((NUM_DOMAINS * STYLE_DIM,), jnp.float32),
        gen_conv1_w=init(keys[2], (C, HIDDEN)),
        gen_conv1_b=jnp.zeros((HIDDEN,), jnp.float32),
        gen_style_w=init(keys[3], (STYLE_DIM, 2 * HIDDEN)),
        gen_style_b=jnp.zeros((2 * HIDDEN,), jnp.float32),
        gen_conv2_w=init(keys[4], (HIDDEN, C)),
        gen_conv2_b=jnp.zeros((C,), jnp.float32),
    )


# ---------------- forward (matches CycleConsistencyLoss.forward) ----------------

def cycle_consistency_loss(params, x_real, y_real, x_fake):
    b, c, h, w = x_real.shape
    assert x_fake.shape == x_real.shape
    assert y_real.ndim == 2 and y_real.shape[0] == b
    hw = h * w
    bhw = b * hw

    # Lane-dense layout: channels on sublanes, (batch*spatial) on lanes.
    xr = x_real.reshape(b, c, hw)
    xf = x_fake.reshape(b, c, hw)
    x_cat = jnp.concatenate([xr, xf], axis=1)                 # (B, 2C, HW)
    x_cat = jnp.transpose(x_cat, (1, 0, 2)).reshape(2 * c, bhw)  # (2C, B*HW)

    # Block-diagonal fused weight: rows 0:HIDDEN = enc_conv (x_real channels),
    # rows HIDDEN:2H = gen_conv1 (x_fake channels).
    enc_wT = params["enc_conv_w"].T                           # (HIDDEN, C)
    gen1_wT = params["gen_conv1_w"].T                         # (HIDDEN, C)
    z = jnp.zeros_like(enc_wT)
    blk_w = jnp.concatenate(
        [jnp.concatenate([enc_wT, z], axis=1),
         jnp.concatenate([z, gen1_wT], axis=1)], axis=0)      # (2H, 2C) f32
    blk_b = jnp.concatenate(
        [params["enc_conv_b"], params["gen_conv1_b"]])[:, None]  # (2H, 1)

    enc_fc_wT = params["enc_fc_w"].T                          # (ND*S, HIDDEN)
    enc_fc_b = params["enc_fc_b"][:, None]                    # (ND*S, 1)
    gen_style_wT = params["gen_style_w"].T                    # (2H, S)
    gen_style_b = params["gen_style_b"][:, None]              # (2H, 1)
    conv2_wT = params["gen_conv2_w"].T                        # (C, HIDDEN)
    conv2_b = params["gen_conv2_b"][:, None]                  # (C, 1)

    # Domain weighting expanded per style element + selection matrix,
    # so style-select is a tiny matmul (no in-kernel reshape needed).
    y_exp_T = jnp.repeat(y_real, STYLE_DIM, axis=1).T         # (ND*S, B)
    sel_T = jnp.tile(jnp.eye(STYLE_DIM, dtype=jnp.float32),
                     (1, NUM_DOMAINS))                         # (S, ND*S)

    # Per-batch GAP / broadcast as matmuls (batch folded onto the lane axis).
    eye_b = jnp.eye(b, dtype=jnp.float32)
    avg_mat = jnp.kron(eye_b, jnp.ones((hw, 1), jnp.float32)) / hw   # (B*HW, B)
    expand_mat = jnp.kron(eye_b, jnp.ones((1, hw), jnp.float32))     # (B, B*HW)

    inputs = (x_cat, y_exp_T, sel_T, avg_mat, expand_mat,
              blk_w, blk_b, enc_fc_wT, enc_fc_b,
              gen_style_wT, gen_style_b, conv2_wT, conv2_b)

    flops = (2 * (2 * HIDDEN) * (2 * c) * bhw          # fused input convs
             + 2 * HIDDEN * bhw * b                     # GAP matmul
             + 2 * (NUM_DOMAINS * STYLE_DIM) * HIDDEN * b
             + 2 * (2 * HIDDEN) * b * bhw               # AdaIN broadcast matmul
             + 2 * c * HIDDEN * bhw                     # gen_conv2
             + 8 * HIDDEN * bhw)                        # ReLU / AdaIN / L1-ish
    bytes_accessed = sum(int(a.size) * a.dtype.itemsize for a in inputs) + 4

    out = pl.pallas_call(
        _cycle_loss_kernel,
        out_shape=jax.ShapeDtypeStruct((1, 1), jnp.float32),
        in_specs=[_VMEM] * len(inputs),
        out_specs=_SMEM,
        compiler_params=pltpu.CompilerParams(vmem_limit_bytes=8 * 1024 * 1024),
        cost_estimate=pl.CostEstimate(flops=flops, transcendentals=0,
                                      bytes_accessed=bytes_accessed),
    )(*inputs)
    return out[0, 0]


# ---------------- pure-JAX reference (for a sanity check only) ----------------

def _reference_loss(params, x_real, y_real, x_fake):
    b, c, h, w = x_real.shape

    def to_mat(img):
        return jnp.transpose(img, (0, 2, 3, 1)).reshape(b * h * w, c)

    xr = to_mat(x_real)
    xf = to_mat(x_fake)
    feat = jax.nn.relu(xr @ params["enc_conv_w"] + params["enc_conv_b"])
    pooled = jnp.mean(feat.reshape(b, h * w, HIDDEN), axis=1)
    styles = (pooled @ params["enc_fc_w"] + params["enc_fc_b"]
              ).reshape(b, NUM_DOMAINS, STYLE_DIM)
    s_x = jnp.sum(styles * y_real[:, :, None], axis=1)
    g1 = jax.nn.relu(xf @ params["gen_conv1_w"] + params["gen_conv1_b"])
    gb = s_x @ params["gen_style_w"] + params["gen_style_b"]
    gamma, beta = gb[:, :HIDDEN], gb[:, HIDDEN:]
    mod = (g1.reshape(b, h * w, HIDDEN) * (1.0 + gamma[:, None, :])
           + beta[:, None, :])
    x_recon = (mod.reshape(b * h * w, HIDDEN) @ params["gen_conv2_w"]
               + params["gen_conv2_b"])
    return jnp.mean(jnp.abs(xr - x_recon))


if __name__ == "__main__":
    key = jax.random.PRNGKey(0)
    k1, k2, k3 = jax.random.split(key, 3)

    x_real = jax.random.normal(k1, (B, C, H, W), dtype=jnp.float32)
    x_fake = jax.random.normal(k2, (B, C, H, W), dtype=jnp.float32)
    # y_real: (B, NUM_DOMAINS) domain weighting (soft one-hot)
    y_real = jax.nn.softmax(
        jax.random.normal(k3, (B, NUM_DOMAINS), dtype=jnp.float32), axis=-1)

    params = make_params()

    loss = jax.jit(cycle_consistency_loss)(params, x_real, y_real, x_fake)
    loss = jax.block_until_ready(loss)
    assert loss.shape == () and jnp.isfinite(loss)

    ref = _reference_loss(params, x_real, y_real, x_fake)
    assert abs(float(loss) - float(ref)) < 2e-3, (float(loss), float(ref))

    print("KERNEL_OK")
</pallas_src>

<mosaic_0001>
module attributes {stable_mosaic.version = 11 : i64} {
  func.func @_cycle_loss_kernel(%arg0: memref<8x512xf32, #tpu.memory_space<vmem>>, %arg1: memref<32x2xf32, #tpu.memory_space<vmem>>, %arg2: memref<8x32xf32, #tpu.memory_space<vmem>>, %arg3: memref<512x2xf32, #tpu.memory_space<vmem>>, %arg4: memref<2x512xf32, #tpu.memory_space<vmem>>, %arg5: memref<64x8xf32, #tpu.memory_space<vmem>>, %arg6: memref<64x1xf32, #tpu.memory_space<vmem>>, %arg7: memref<32x32xf32, #tpu.memory_space<vmem>>, %arg8: memref<32x1xf32, #tpu.memory_space<vmem>>, %arg9: memref<64x8xf32, #tpu.memory_space<vmem>>, %arg10: memref<64x1xf32, #tpu.memory_space<vmem>>, %arg11: memref<4x32xf32, #tpu.memory_space<vmem>>, %arg12: memref<4x1xf32, #tpu.memory_space<vmem>>, %arg13: memref<1x1xf32, #tpu.memory_space<smem>>) attributes {dimension_semantics = [], scalar_prefetch = 0 : i64, scratch_operands = 0 : i64, tpu.core_type = #tpu.core_type<tc>} {
    %c0 = arith.constant 0 : index
    %c0_0 = arith.constant 0 : index
    %0 = vector.load %arg0[%c0, %c0_0] : memref<8x512xf32, #tpu.memory_space<vmem>>, vector<8x512xf32>
    %1 = vector.extract_strided_slice %0 {offsets = [0, 0], sizes = [4, 512], strides = [1, 1]} : vector<8x512xf32> to vector<4x512xf32>
    %c0_1 = arith.constant 0 : index
    %c0_2 = arith.constant 0 : index
    %2 = vector.load %arg5[%c0_1, %c0_2] : memref<64x8xf32, #tpu.memory_space<vmem>>, vector<64x8xf32>
    %cst = arith.constant dense<0.000000e+00> : vector<64x512xf32>
    %3 = tpu.matmul %2, %0, %cst {dimension_numbers = #tpu.dot_dimension_numbers<[1], [0], [0], [1], [0, 0, 1, 1], [], []>} : vector<64x8xf32>, vector<8x512xf32>, vector<64x512xf32> -> vector<64x512xf32>
    %c0_3 = arith.constant 0 : index
    %c0_4 = arith.constant 0 : index
    %4 = vector.load %arg6[%c0_3, %c0_4] : memref<64x1xf32, #tpu.memory_space<vmem>>, vector<64x1xf32>
    %5 = vector.broadcast %4 : vector<64x1xf32> to vector<64x512xf32>
    %6 = arith.addf %3, %5 : vector<64x512xf32>
    %cst_5 = arith.constant 0.000000e+00 : f32
    %7 = vector.broadcast %cst_5 : f32 to vector<64x512xf32>
    %8 = arith.maximumf %6, %7 : vector<64x512xf32>
    %9 = vector.extract_strided_slice %8 {offsets = [0, 0], sizes = [32, 512], strides = [1, 1]} : vector<64x512xf32> to vector<32x512xf32>
    %10 = vector.extract_strided_slice %8 {offsets = [32, 0], sizes = [32, 512], strides = [1, 1]} : vector<64x512xf32> to vector<32x512xf32>
    %c0_6 = arith.constant 0 : index
    %c0_7 = arith.constant 0 : index
    %11 = vector.load %arg3[%c0_6, %c0_7] : memref<512x2xf32, #tpu.memory_space<vmem>>, vector<512x2xf32>
    %cst_8 = arith.constant dense<0.000000e+00> : vector<32x2xf32>
    %12 = tpu.matmul %9, %11, %cst_8 {dimension_numbers = #tpu.dot_dimension_numbers<[1], [0], [0], [1], [0, 0, 1, 1], [], []>} : vector<32x512xf32>, vector<512x2xf32>, vector<32x2xf32> -> vector<32x2xf32>
    %c0_9 = arith.constant 0 : index
    %c0_10 = arith.constant 0 : index
    %13 = vector.load %arg7[%c0_9, %c0_10] : memref<32x32xf32, #tpu.memory_space<vmem>>, vector<32x32xf32>
    %cst_11 = arith.constant dense<0.000000e+00> : vector<32x2xf32>
    %14 = tpu.matmul %13, %12, %cst_11 {dimension_numbers = #tpu.dot_dimension_numbers<[1], [0], [0], [1], [0, 0, 1, 1], [], []>} : vector<32x32xf32>, vector<32x2xf32>, vector<32x2xf32> -> vector<32x2xf32>
    %c0_12 = arith.constant 0 : index
    %c0_13 = arith.constant 0 : index
    %15 = vector.load %arg8[%c0_12, %c0_13] : memref<32x1xf32, #tpu.memory_space<vmem>>, vector<32x1xf32>
    %16 = vector.broadcast %15 : vector<32x1xf32> to vector<32x2xf32>
    %17 = arith.addf %14, %16 : vector<32x2xf32>
    %c0_14 = arith.constant 0 : index
    %c0_15 = arith.constant 0 : index
    %18 = vector.load %arg2[%c0_14, %c0_15] : memref<8x32xf32, #tpu.memory_space<vmem>>, vector<8x32xf32>
    %c0_16 = arith.constant 0 : index
    %c0_17 = arith.constant 0 : index
    %19 = vector.load %arg1[%c0_16, %c0_17] : memref<32x2xf32, #tpu.memory_space<vmem>>, vector<32x2xf32>
    %20 = arith.mulf %17, %19 : vector<32x2xf32>
    %cst_18 = arith.constant dense<0.000000e+00> : vector<8x2xf32>
    %21 = tpu.matmul %18, %20, %cst_18 {dimension_numbers = #tpu.dot_dimension_numbers<[1], [0], [0], [1], [0, 0, 1, 1], [], []>} : vector<8x32xf32>, vector<32x2xf32>, vector<8x2xf32> -> vector<8x2xf32>
    %c0_19 = arith.constant 0 : index
    %c0_20 = arith.constant 0 : index
    %22 = vector.load %arg9[%c0_19, %c0_20] : memref<64x8xf32, #tpu.memory_space<vmem>>, vector<64x8xf32>
    %cst_21 = arith.constant dense<0.000000e+00> : vector<64x2xf32>
    %23 = tpu.matmul %22, %21, %cst_21 {dimension_numbers = #tpu.dot_dimension_numbers<[1], [0], [0], [1], [0, 0, 1, 1], [], []>} : vector<64x8xf32>, vector<8x2xf32>, vector<64x2xf32> -> vector<64x2xf32>
    %c0_22 = arith.constant 0 : index
    %c0_23 = arith.constant 0 : index
    %24 = vector.load %arg10[%c0_22, %c0_23] : memref<64x1xf32, #tpu.memory_space<vmem>>, vector<64x1xf32>
    %25 = vector.broadcast %24 : vector<64x1xf32> to vector<64x2xf32>
    %26 = arith.addf %23, %25 : vector<64x2xf32>
    %c0_24 = arith.constant 0 : index
    %c0_25 = arith.constant 0 : index
    %27 = vector.load %arg4[%c0_24, %c0_25] : memref<2x512xf32, #tpu.memory_space<vmem>>, vector<2x512xf32>
    %cst_26 = arith.constant dense<0.000000e+00> : vector<64x512xf32>
    %28 = tpu.matmul %26, %27, %cst_26 {dimension_numbers = #tpu.dot_dimension_numbers<[1], [0], [0], [1], [0, 0, 1, 1], [], []>} : vector<64x2xf32>, vector<2x512xf32>, vector<64x512xf32> -> vector<64x512xf32>
    %29 = vector.extract_strided_slice %28 {offsets = [0, 0], sizes = [32, 512], strides = [1, 1]} : vector<64x512xf32> to vector<32x512xf32>
    %30 = vector.extract_strided_slice %28 {offsets = [32, 0], sizes = [32, 512], strides = [1, 1]} : vector<64x512xf32> to vector<32x512xf32>
    %cst_27 = arith.constant 1.000000e+00 : f32
    %31 = vector.broadcast %cst_27 : f32 to vector<32x512xf32>
    %32 = arith.addf %31, %29 : vector<32x512xf32>
    %33 = arith.mulf %10, %32 : vector<32x512xf32>
    %34 = arith.addf %33, %30 : vector<32x512xf32>
    %c0_28 = arith.constant 0 : index
    %c0_29 = arith.constant 0 : index
    %35 = vector.load %arg11[%c0_28, %c0_29] : memref<4x32xf32, #tpu.memory_space<vmem>>, vector<4x32xf32>
    %cst_30 = arith.constant dense<0.000000e+00> : vector<4x512xf32>
    %36 = tpu.matmul %35, %34, %cst_30 {dimension_numbers = #tpu.dot_dimension_numbers<[1], [0], [0], [1], [0, 0, 1, 1], [], []>} : vector<4x32xf32>, vector<32x512xf32>, vector<4x512xf32> -> vector<4x512xf32>
    %c0_31 = arith.constant 0 : index
    %c0_32 = arith.constant 0 : index
    %37 = vector.load %arg12[%c0_31, %c0_32] : memref<4x1xf32, #tpu.memory_space<vmem>>, vector<4x1xf32>
    %38 = vector.broadcast %37 : vector<4x1xf32> to vector<4x512xf32>
    %39 = arith.addf %36, %38 : vector<4x512xf32>
    %40 = arith.subf %1, %39 : vector<4x512xf32>
    %41 = math.absf %40 : vector<4x512xf32>
    %42 = vector.shape_cast %41 : vector<4x512xf32> to vector<1x4x512xf32>
    %cst_33 = arith.constant dense<0.000000e+00> : vector<1xf32>
    %43 = vector.multi_reduction <add>, %42, %cst_33 [1, 2] : vector<1x4x512xf32> to vector<1xf32>
    %44 = vector.shape_cast %43 : vector<1xf32> to vector<1x1x1xf32>
    %45 = vector.extract %44[0, 0, 0] : f32 from vector<1x1x1xf32>
    %cst_34 = arith.constant 2.048000e+03 : f32
    %46 = arith.divf %45, %cst_34 : f32
    %c0_35 = arith.constant 0 : index
    %c0_36 = arith.constant 0 : index
    %47 = memref.load %arg13[%c0_35, %c0_36] : memref<1x1xf32, #tpu.memory_space<smem>>
    memref.store %46, %arg13[%c0_35, %c0_36] : memref<1x1xf32, #tpu.memory_space<smem>>
    return
  }
}

</mosaic_0001>

<llo_original>
// kernel: tile.9
$region0: #{tile.9}
  %s0 = inlined_call_operand.vmem [shape: f32[8,4,8], index: 0, kind: input, shape index: {}]
  %s1 = inlined_call_operand.vmem [shape: f32[8,32], index: 1, kind: output, shape index: {}]
  $region1: #{tile.9} parent=0
    #allocation0 [shape = 'u8[32768]{0}', space=vmem, size = 0x8000, scoped, tag = 'scoped mem for input reshape']
    %s3 = ssub.s32 16, 1
    %s4 = scalar_lea.vmem %s0, 28
    %v5 = vld [vmem:[%s4] sm:%s3]
    %s6 = scalar_lea.vmem [#allocation0], 56
    %7 = vst [vmem:[%s6] sm:%s3] %v5
    %s8 = scalar_lea.vmem %s0, 24
    %v9 = vld [vmem:[%s8] sm:%s3]
    %s10 = scalar_lea.vmem [#allocation0], 48
    %11 = vst [vmem:[%s10] sm:%s3] %v9
    %s12 = scalar_lea.vmem %s0, 20
    %v13 = vld [vmem:[%s12] sm:%s3]
    %s14 = scalar_lea.vmem [#allocation0], 40
    %15 = vst [vmem:[%s14] sm:%s3] %v13
    %s16 = scalar_lea.vmem %s0, 16
    %v17 = vld [vmem:[%s16] sm:%s3]
    %s18 = scalar_lea.vmem [#allocation0], 32
    %19 = vst [vmem:[%s18] sm:%s3] %v17
    %s20 = scalar_lea.vmem %s0, 12
    %v21 = vld [vmem:[%s20] sm:%s3]
    %s22 = scalar_lea.vmem [#allocation0], 24
    %23 = vst [vmem:[%s22] sm:%s3] %v21
    %s24 = scalar_lea.vmem %s0, 8
    %v25 = vld [vmem:[%s24] sm:%s3]
    %s26 = scalar_lea.vmem [#allocation0], 16
    %27 = vst [vmem:[%s26] sm:%s3] %v25
    %s28 = scalar_lea.vmem %s0, 4
    %v29 = vld [vmem:[%s28] sm:%s3]
    %s30 = scalar_lea.vmem [#allocation0], 8
    %31 = vst [vmem:[%s30] sm:%s3] %v29
    %v32 = vld [vmem:[%s0] sm:%s3]
    %33 = vst [vmem:[#allocation0] sm:%s3] %v32
    %v34 = vld [vmem:[#allocation0] ss:$8 sm:$0xf]
    %v35 = vld [vmem:[#allocation0] ss:$8 sm:$0xf0]
    %vm36 = vcmask 1047556
    %v37 = vsel %vm36, %v35, %v34
    %vm38 = vcmask 64512
    %39 = vst.msk [vmem:[%s1] sm:$0xff] %vm38, %v37
    %s40 = scalar_lea.vmem [#allocation0], 3
    %v41 = vld [vmem:[%s40] ss:$8 sm:$0xf]
    %s42 = scalar_lea.vmem [#allocation0], 3
    %v43 = vld [vmem:[%s42] ss:$8 sm:$0xf0]
    %vm44 = vcmask 1047556
    %v45 = vsel %vm44, %v43, %v41
    %46 = vrot.lane.b32.xlu0 %v45, 24
    %v47 = vpop.permute.xlu0 %46
    %vm48 = vcmask 261312
    %49 = vst.msk [vmem:[%s1] sm:$0xff] %vm48, %v47
    %s50 = scalar_lea.vmem [#allocation0], 2
    %v51 = vld [vmem:[%s50] ss:$8 sm:$0xf]
    %s52 = scalar_lea.vmem [#allocation0], 2
    %v53 = vld [vmem:[%s52] ss:$8 sm:$0xf0]
    %vm54 = vcmask 1047556
    %v55 = vsel %vm54, %v53, %v51
    %56 = vrot.lane.b32.xlu0 %v55, 16
    %v57 = vpop.permute.xlu0 %56
    %vm58 = vcmask 195712
    %59 = vst.msk [vmem:[%s1] sm:$0xff] %vm58, %v57
    %s60 = scalar_lea.vmem [#allocation0], 1
    %v61 = vld [vmem:[%s60] ss:$8 sm:$0xf]
    %s62 = scalar_lea.vmem [#allocation0], 1
    %v63 = vld [vmem:[%s62] ss:$8 sm:$0xf0]
    %vm64 = vcmask 1047556
    %v65 = vsel %vm64, %v63, %v61
    %66 = vrot.lane.b32.xlu0 %v65, 8
    %v67 = vpop.permute.xlu0 %66
    %vm68 = vcmask 130112
    %69 = vst.msk [vmem:[%s1] sm:$0xff] %vm68, %v67

// kernel: cycle_consistency_loss.1
$region0: #{cycle_consistency_loss.1}
  #allocation0 [shape = 'u32[]', space=smem, size = 0x4, offset = 0x4, fixed_abs, tag = 'smem constant byte address 0x4 - core index']
  #allocation1 [shape = 'u32[72,128]{1,0:T(1,128)}', space=vmem, size = 0x9000, scoped, tag = 'internal scratch']
  %s0 = inlined_call_operand.vmem [shape: f32[8,512], index: 0, kind: input, shape index: {}]
  %s1 = inlined_call_operand.vmem [shape: f32[32,2], index: 1, kind: input, shape index: {}]
  %s2 = inlined_call_operand.vmem [shape: f32[8,32], index: 2, kind: input, shape index: {}]
  %s3 = inlined_call_operand.vmem [shape: f32[512,2], index: 3, kind: input, shape index: {}]
  %s4 = inlined_call_operand.vmem [shape: f32[2,512], index: 4, kind: input, shape index: {}]
  %s5 = inlined_call_operand.vmem [shape: f32[64,8], index: 5, kind: input, shape index: {}]
  %s6 = inlined_call_operand.vmem [shape: f32[64,1], index: 6, kind: input, shape index: {}]
  %s7 = inlined_call_operand.vmem [shape: f32[32,32], index: 7, kind: input, shape index: {}]
  %s8 = inlined_call_operand.vmem [shape: f32[32,1], index: 8, kind: input, shape index: {}]
  %s9 = inlined_call_operand.vmem [shape: f32[64,8], index: 9, kind: input, shape index: {}]
  %s10 = inlined_call_operand.vmem [shape: f32[64,1], index: 10, kind: input, shape index: {}]
  %s11 = inlined_call_operand.vmem [shape: f32[4,32], index: 11, kind: input, shape index: {}]
  %s12 = inlined_call_operand.vmem [shape: f32[4,1], index: 12, kind: input, shape index: {}]
  %s13 = inlined_call_operand.hbm [shape: f32[1,1], index: 13, kind: output, shape index: {}]
  %s14 = sld [smem:[#allocation0]]
  $region62: #{cycle_consistency_loss.1} parent=0
    _
  %s16 = ssub.s32 1, %s14
  %s17 = scalar_select 0, %s16, %s14
  $region1: #{cycle_consistency_loss.1} parent=0
    #allocation2 [shape = 'u8[512]{0}', space=smem, size = 0x200, scoped, tag = 'output window, operand 0, single buffered']
    #allocation3 [shape = 's32[1]{0}', space=sflag, size = 0x4, scoped, tag = 'scoped memory for cycle_consistency_loss.1']
    %18 = vsyncpa [#allocation3], 0
    // Predicated region
    $region2: #{cycle_consistency_loss.1} parent=1 // pred_check
      _
    $region3: #{cycle_consistency_loss.1} parent=1 // pred_check_branch
      %20 = sbr.rel (0) target = $region5
    $region4: #{cycle_consistency_loss.1} parent=1 // pred_region
      _
    $region5: #{cycle_consistency_loss.1} parent=1 // pred_fallthru
      _
    // Predicated region
    $region6: #{cycle_consistency_loss.1} parent=1 // pred_check
      _
    $region7: #{cycle_consistency_loss.1} parent=1 // pred_check_branch
      %22 = sbr.rel (0) target = $region9
    $region8: #{cycle_consistency_loss.1} parent=1 // pred_region
      _
    $region9: #{cycle_consistency_loss.1} parent=1 // pred_fallthru
      _
    // Predicated region
    $region10: #{cycle_consistency_loss.1} parent=1 // pred_check
      _
    $region11: #{cycle_consistency_loss.1} parent=1 // pred_check_branch
      %24 = sbr.rel (0) target = $region13
    $region12: #{cycle_consistency_loss.1} parent=1 // pred_region
      _
    $region13: #{cycle_consistency_loss.1} parent=1 // pred_fallthru
      _
    // Predicated region
    $region14: #{cycle_consistency_loss.1} parent=1 // pred_check
      _
    $region15: #{cycle_consistency_loss.1} parent=1 // pred_check_branch
      %26 = sbr.rel (0) target = $region17
    $region16: #{cycle_consistency_loss.1} parent=1 // pred_region
      _
    $region17: #{cycle_consistency_loss.1} parent=1 // pred_fallthru
      _
    // Predicated region
    $region18: #{cycle_consistency_loss.1} parent=1 // pred_check
      _
    $region19: #{cycle_consistency_loss.1} parent=1 // pred_check_branch
      %28 = sbr.rel (0) target = $region21
    $region20: #{cycle_consistency_loss.1} parent=1 // pred_region
      _
    $region21: #{cycle_consistency_loss.1} parent=1 // pred_fallthru
      _
    // Predicated region
    $region22: #{cycle_consistency_loss.1} parent=1 // pred_check
      _
    $region23: #{cycle_consistency_loss.1} parent=1 // pred_check_branch
      %30 = sbr.rel (0) target = $region25
    $region24: #{cycle_consistency_loss.1} parent=1 // pred_region
      _
    $region25: #{cycle_consistency_loss.1} parent=1 // pred_fallthru
      _
    // Predicated region
    $region26: #{cycle_consistency_loss.1} parent=1 // pred_check
      _
    $region27: #{cycle_consistency_loss.1} parent=1 // pred_check_branch
      %32 = sbr.rel (0) target = $region29
    $region28: #{cycle_consistency_loss.1} parent=1 // pred_region
      _
    $region29: #{cycle_consistency_loss.1} parent=1 // pred_fallthru
      _
    // Predicated region
    $region30: #{cycle_consistency_loss.1} parent=1 // pred_check
      _
    $region31: #{cycle_consistency_loss.1} parent=1 // pred_check_branch
      %34 = sbr.rel (0) target = $region33
    $region32: #{cycle_consistency_loss.1} parent=1 // pred_region
      _
    $region33: #{cycle_consistency_loss.1} parent=1 // pred_fallthru
      _
    // Predicated region
    $region34: #{cycle_consistency_loss.1} parent=1 // pred_check
      _
    $region35: #{cycle_consistency_loss.1} parent=1 // pred_check_branch
      %36 = sbr.rel (0) target = $region37
    $region36: #{cycle_consistency_loss.1} parent=1 // pred_region
      _
    $region37: #{cycle_consistency_loss.1} parent=1 // pred_fallthru
      _
    // Predicated region
    $region38: #{cycle_consistency_loss.1} parent=1 // pred_check
      _
    $region39: #{cycle_consistency_loss.1} parent=1 // pred_check_branch
      %38 = sbr.rel (0) target = $region41
    $region40: #{cycle_consistency_loss.1} parent=1 // pred_region
      _
    $region41: #{cycle_consistency_loss.1} parent=1 // pred_fallthru
      _
    // Predicated region
    $region42: #{cycle_consistency_loss.1} parent=1 // pred_check
      _
    $region43: #{cycle_consistency_loss.1} parent=1 // pred_check_branch
      %40 = sbr.rel (0) target = $region45
    $region44: #{cycle_consistency_loss.1} parent=1 // pred_region
      _
    $region45: #{cycle_consistency_loss.1} parent=1 // pred_fallthru
      _
    // Predicated region
    $region46: #{cycle_consistency_loss.1} parent=1 // pred_check
      _
    $region47: #{cycle_consistency_loss.1} parent=1 // pred_check_branch
      %42 = sbr.rel (0) target = $region49
    $region48: #{cycle_consistency_loss.1} parent=1 // pred_region
      _
    $region49: #{cycle_consistency_loss.1} parent=1 // pred_fallthru
      _
    // Predicated region
    $region50: #{cycle_consistency_loss.1} parent=1 // pred_check
      _
    $region51: #{cycle_consistency_loss.1} parent=1 // pred_check_branch
      %44 = sbr.rel (0) target = $region53
    $region52: #{cycle_consistency_loss.1} parent=1 // pred_region
      _
    $region53: #{cycle_consistency_loss.1} parent=1 // pred_fallthru
      _
    %v45 = vld [vmem:[%s0] sm:$0xff]
    %v46 = vld [vmem:[%s0 + $0x8] sm:$0xff]
    %v47 = vld [vmem:[%s0 + $0x10] sm:$0xff]
    %v48 = vld [vmem:[%s0 + $0x18] sm:$0xff]
    %v49 = vld [vmem:[%s5] sm:$0xff]
    %v50 = vld [vmem:[%s5 + $0x8] sm:$0xff]
    %v51 = vld [vmem:[%s5 + $0x10] sm:$0xff]
    %v52 = vld [vmem:[%s5 + $0x18] sm:$0xff]
    %v53 = vld [vmem:[%s5 + $0x20] sm:$0xff]
    %v54 = vld [vmem:[%s5 + $0x28] sm:$0xff]
    %v55 = vld [vmem:[%s5 + $0x30] sm:$0xff]
    %v56 = vld [vmem:[%s5 + $0x38] sm:$0xff]
    %v57 = vld [vmem:[%s6] sm:$0xff]
    %v58 = vld [vmem:[%s6 + $0x8] sm:$0xff]
    %v59 = vld [vmem:[%s6 + $0x10] sm:$0xff]
    %v60 = vld [vmem:[%s6 + $0x18] sm:$0xff]
    %v61 = vld [vmem:[%s6 + $0x20] sm:$0xff]
    %v62 = vld [vmem:[%s6 + $0x28] sm:$0xff]
    %v63 = vld [vmem:[%s6 + $0x30] sm:$0xff]
    %v64 = vld [vmem:[%s6 + $0x38] sm:$0xff]
    %66 = vset.pattern.permute.xlu0 0
    %67 = vperm.xlu0 %66, %v57
    %v68 = vpop.permute.xlu0 %67
    %71 = vset.pattern.permute.xlu0 0
    %72 = vperm.xlu0 %71, %v58
    %v73 = vpop.permute.xlu0 %72
    %76 = vset.pattern.permute.xlu0 0
    %77 = vperm.xlu0 %76, %v59
    %v78 = vpop.permute.xlu0 %77
    %81 = vset.pattern.permute.xlu0 0
    %82 = vperm.xlu0 %81, %v60
    %v83 = vpop.permute.xlu0 %82
    %86 = vset.pattern.permute.xlu0 0
    %87 = vperm.xlu0 %86, %v61
    %v88 = vpop.permute.xlu0 %87
    %91 = vset.pattern.permute.xlu0 0
    %92 = vperm.xlu0 %91, %v62
    %v93 = vpop.permute.xlu0 %92
    %96 = vset.pattern.permute.xlu0 0
    %97 = vperm.xlu0 %96, %v63
    %v98 = vpop.permute.xlu0 %97
    %101 = vset.pattern.permute.xlu0 0
    %102 = vperm.xlu0 %101, %v64
    %v103 = vpop.permute.xlu0 %102
    %vm105 = vcmask 64512
    %v107 = vsel %vm105, %v49, 0
    %v110 = vsel %vm105, %v50, 0
    %v113 = vsel %vm105, %v51, 0
    %v116 = vsel %vm105, %v52, 0
    %v119 = vsel %vm105, %v53, 0
    %v122 = vsel %vm105, %v54, 0
    %v125 = vsel %vm105, %v55, 0
    %v128 = vsel %vm105, %v56, 0
    %130 = vmatpush.msra.mxu0 0.0
    %131 = vmatpush.msra.mxu0 0.0
    %132 = vmatpush.msra.mxu0 0.0
    %133 = vmatpush.msra.mxu0 0.0
    %134 = vmatpush.msra.mxu0 0.0
    %135 = vmatpush.msra.mxu0 0.0
    %136 = vmatpush.msra.mxu0 0.0
    %137 = vmatpush.msra.mxu0 0.0
    %138 = vmatpush.msra.mxu0 0.0
    %139 = vmatpush.msra.mxu0 0.0
    %140 = vmatpush.msra.mxu0 0.0
    %141 = vmatpush.msra.mxu0 0.0
    %142 = vmatpush.msra.mxu0 0.0
    %143 = vmatpush.msra.mxu0 0.0
    %144 = vmatpush.msra.mxu0 0.0
    %145 = vmatpush.msra.mxu0 %v45
    %146 = vmatmul.f32.gmra.mxu0 %v107
    %v147 = vpop.f32.mrf.mxu0
    %v148 = vadd.f32 %v68, %v147
    %149 = vmatmul.f32.gmra.mxu0 %v110
    %v150 = vpop.f32.mrf.mxu0
    %v151 = vadd.f32 %v73, %v150
    %152 = vmatmul.f32.gmra.mxu0 %v113
    %v153 = vpop.f32.mrf.mxu0
    %v154 = vadd.f32 %v78, %v153
    %155 = vmatmul.f32.gmra.mxu0 %v116
    %v156 = vpop.f32.mrf.mxu0
    %v157 = vadd.f32 %v83, %v156
    %158 = vmatmul.f32.gmra.mxu0 %v119
    %v159 = vpop.f32.mrf.mxu0
    %v160 = vadd.f32 %v88, %v159
    %161 = vmatmul.f32.gmra.mxu0 %v122
    %v162 = vpop.f32.mrf.mxu0
    %v163 = vadd.f32 %v93, %v162
    %164 = vmatmul.f32.gmra.mxu0 %v125
    %v165 = vpop.f32.mrf.mxu0
    %v166 = vadd.f32 %v98, %v165
    %167 = vmatmul.f32.gmra.mxu0 %v128
    %v168 = vpop.f32.mrf.mxu0
    %v169 = vadd.f32 %v103, %v168
    %170 = vdwg.mxu0
    %171 = vmatpush.msra.mxu0 0.0
    %172 = vmatpush.msra.mxu0 0.0
    %173 = vmatpush.msra.mxu0 0.0
    %174 = vmatpush.msra.mxu0 0.0
    %175 = vmatpush.msra.mxu0 0.0
    %176 = vmatpush.msra.mxu0 0.0
    %177 = vmatpush.msra.mxu0 0.0
    %178 = vmatpush.msra.mxu0 0.0
    %179 = vmatpush.msra.mxu0 0.0
    %180 = vmatpush.msra.mxu0 0.0
    %181 = vmatpush.msra.mxu0 0.0
    %182 = vmatpush.msra.mxu0 0.0
    %183 = vmatpush.msra.mxu0 0.0
    %184 = vmatpush.msra.mxu0 0.0
    %185 = vmatpush.msra.mxu0 0.0
    %186 = vmatpush.msra.mxu0 %v46
    %187 = vmatmul.f32.gmra.mxu0 %v107
    %v188 = vpop.f32.mrf.mxu0
    %v189 = vadd.f32 %v68, %v188
    %190 = vmatmul.f32.gmra.mxu0 %v110
    %v191 = vpop.f32.mrf.mxu0
    %v192 = vadd.f32 %v73, %v191
    %193 = vmatmul.f32.gmra.mxu0 %v113
    %v194 = vpop.f32.mrf.mxu0
    %v195 = vadd.f32 %v78, %v194
    %196 = vmatmul.f32.gmra.mxu0 %v116
    %v197 = vpop.f32.mrf.mxu0
    %v198 = vadd.f32 %v83, %v197
    %199 = vmatmul.f32.gmra.mxu0 %v119
    %v200 = vpop.f32.mrf.mxu0
    %v201 = vadd.f32 %v88, %v200
    %202 = vmatmul.f32.gmra.mxu0 %v122
    %v203 = vpop.f32.mrf.mxu0
    %v204 = vadd.f32 %v93, %v203
    %205 = vmatmul.f32.gmra.mxu0 %v125
    %v206 = vpop.f32.mrf.mxu0
    %v207 = vadd.f32 %v98, %v206
    %208 = vmatmul.f32.gmra.mxu0 %v128
    %v209 = vpop.f32.mrf.mxu0
    %v210 = vadd.f32 %v103, %v209
    %211 = vdwg.mxu0
    %212 = vmatpush.msra.mxu0 0.0
    %213 = vmatpush.msra.mxu0 0.0
    %214 = vmatpush.msra.mxu0 0.0
    %215 = vmatpush.msra.mxu0 0.0
    %216 = vmatpush.msra.mxu0 0.0
    %217 = vmatpush.msra.mxu0 0.0
    %218 = vmatpush.msra.mxu0 0.0
    %219 = vmatpush.msra.mxu0 0.0
    %220 = vmatpush.msra.mxu0 0.0
    %221 = vmatpush.msra.mxu0 0.0
    %222 = vmatpush.msra.mxu0 0.0
    %223 = vmatpush.msra.mxu0 0.0
    %224 = vmatpush.msra.mxu0 0.0
    %225 = vmatpush.msra.mxu0 0.0
    %226 = vmatpush.msra.mxu0 0.0
    %227 = vmatpush.msra.mxu0 %v47
    %228 = vmatmul.f32.gmra.mxu0 %v107
    %v229 = vpop.f32.mrf.mxu0
    %v230 = vadd.f32 %v68, %v229
    %231 = vmatmul.f32.gmra.mxu0 %v110
    %v232 = vpop.f32.mrf.mxu0
    %v233 = vadd.f32 %v73, %v232
    %234 = vmatmul.f32.gmra.mxu0 %v113
    %v235 = vpop.f32.mrf.mxu0
    %v236 = vadd.f32 %v78, %v235
    %237 = vmatmul.f32.gmra.mxu0 %v116
    %v238 = vpop.f32.mrf.mxu0
    %v239 = vadd.f32 %v83, %v238
    %240 = vmatmul.f32.gmra.mxu0 %v119
    %v241 = vpop.f32.mrf.mxu0
    %v242 = vadd.f32 %v88, %v241
    %243 = vmatmul.f32.gmra.mxu0 %v122
    %v244 = vpop.f32.mrf.mxu0
    %v245 = vadd.f32 %v93, %v244
    %246 = vmatmul.f32.gmra.mxu0 %v125
    %v247 = vpop.f32.mrf.mxu0
    %v248 = vadd.f32 %v98, %v247
    %249 = vmatmul.f32.gmra.mxu0 %v128
    %v250 = vpop.f32.mrf.mxu0
    %v251 = vadd.f32 %v103, %v250
    %252 = vdwg.mxu0
    %253 = vmatpush.msra.mxu0 0.0
    %254 = vmatpush.msra.mxu0 0.0
    %255 = vmatpush.msra.mxu0 0.0
    %256 = vmatpush.msra.mxu0 0.0
    %257 = vmatpush.msra.mxu0 0.0
    %258 = vmatpush.msra.mxu0 0.0
    %259 = vmatpush.msra.mxu0 0.0
    %260 = vmatpush.msra.mxu0 0.0
    %261 = vmatpush.msra.mxu0 0.0
    %262 = vmatpush.msra.mxu0 0.0
    %263 = vmatpush.msra.mxu0 0.0
    %264 = vmatpush.msra.mxu0 0.0
    %265 = vmatpush.msra.mxu0 0.0
    %266 = vmatpush.msra.mxu0 0.0
    %267 = vmatpush.msra.mxu0 0.0
    %268 = vmatpush.msra.mxu0 %v48
    %269 = vmatmul.f32.gmra.mxu0 %v107
    %v270 = vpop.f32.mrf.mxu0
    %v271 = vadd.f32 %v68, %v270
    %272 = vmatmul.f32.gmra.mxu0 %v110
    %v273 = vpop.f32.mrf.mxu0
    %v274 = vadd.f32 %v73, %v273
    %275 = vmatmul.f32.gmra.mxu0 %v113
    %v276 = vpop.f32.mrf.mxu0
    %v277 = vadd.f32 %v78, %v276
    %278 = vmatmul.f32.gmra.mxu0 %v116
    %v279 = vpop.f32.mrf.mxu0
    %v280 = vadd.f32 %v83, %v279
    %281 = vmatmul.f32.gmra.mxu0 %v119
    %v282 = vpop.f32.mrf.mxu0
    %v283 = vadd.f32 %v88, %v282
    %284 = vmatmul.f32.gmra.mxu0 %v122
    %v285 = vpop.f32.mrf.mxu0
    %v286 = vadd.f32 %v93, %v285
    %287 = vmatmul.f32.gmra.mxu0 %v125
    %v288 = vpop.f32.mrf.mxu0
    %v289 = vadd.f32 %v98, %v288
    %290 = vmatmul.f32.gmra.mxu0 %v128
    %v291 = vpop.f32.mrf.mxu0
    %v292 = vadd.f32 %v103, %v291
    %293 = vdwg.mxu0
    %v294 = vmax.f32 %v148, 0.0
    %v295 = vmax.f32 %v189, 0.0
    %v296 = vmax.f32 %v230, 0.0
    %v297 = vmax.f32 %v271, 0.0
    %v298 = vmax.f32 %v151, 0.0
    %v299 = vmax.f32 %v192, 0.0
    %v300 = vmax.f32 %v233, 0.0
    %v301 = vmax.f32 %v274, 0.0
    %v302 = vmax.f32 %v154, 0.0
    %v303 = vmax.f32 %v195, 0.0
    %v304 = vmax.f32 %v236, 0.0
    %v305 = vmax.f32 %v277, 0.0
    %v306 = vmax.f32 %v157, 0.0
    %v307 = vmax.f32 %v198, 0.0
    %v308 = vmax.f32 %v239, 0.0
    %v309 = vmax.f32 %v280, 0.0
    %v310 = vmax.f32 %v160, 0.0
    %v311 = vmax.f32 %v201, 0.0
    %v312 = vmax.f32 %v242, 0.0
    %v313 = vmax.f32 %v283, 0.0
    %v314 = vmax.f32 %v163, 0.0
    %v315 = vmax.f32 %v204, 0.0
    %v316 = vmax.f32 %v245, 0.0
    %v317 = vmax.f32 %v286, 0.0
    %v318 = vmax.f32 %v166, 0.0
    %v319 = vmax.f32 %v207, 0.0
    %v320 = vmax.f32 %v248, 0.0
    %v321 = vmax.f32 %v289, 0.0
    %v322 = vmax.f32 %v169, 0.0
    %v323 = vmax.f32 %v210, 0.0
    %v324 = vmax.f32 %v251, 0.0
    %v325 = vmax.f32 %v292, 0.0
    %v326 = vld [vmem:[%s3] sm:$0xff]
    %v327 = vld [vmem:[%s3 + $0x8] sm:$0xff]
    %v328 = vld [vmem:[%s3 + $0x10] sm:$0xff]
    %v329 = vld [vmem:[%s3 + $0x18] sm:$0xff]
    %v330 = vld [vmem:[%s3 + $0x20] sm:$0xff]
    %v331 = vld [vmem:[%s3 + $0x28] sm:$0xff]
    %v332 = vld [vmem:[%s3 + $0x30] sm:$0xff]
    %v333 = vld [vmem:[%s3 + $0x38] sm:$0xff]
    %v334 = vld [vmem:[%s3 + $0x40] sm:$0xff]
    %v335 = vld [vmem:[%s3 + $0x48] sm:$0xff]
    %v336 = vld [vmem:[%s3 + $0x50] sm:$0xff]
    %v337 = vld [vmem:[%s3 + $0x58] sm:$0xff]
    %v338 = vld [vmem:[%s3 + $0x60] sm:$0xff]
    %v339 = vld [vmem:[%s3 + $0x68] sm:$0xff]
    %v340 = vld [vmem:[%s3 + $0x70] sm:$0xff]
    %v341 = vld [vmem:[%s3 + $0x78] sm:$0xff]
    %v342 = vld [vmem:[%s3 + $0x80] sm:$0xff]
    %v343 = vld [vmem:[%s3 + $0x88] sm:$0xff]
    %v344 = vld [vmem:[%s3 + $0x90] sm:$0xff]
    %v345 = vld [vmem:[%s3 + $0x98] sm:$0xff]
    %v346 = vld [vmem:[%s3 + $0xa0] sm:$0xff]
    %v347 = vld [vmem:[%s3 + $0xa8] sm:$0xff]
    %v348 = vld [vmem:[%s3 + $0xb0] sm:$0xff]
    %v349 = vld [vmem:[%s3 + $0xb8] sm:$0xff]
    %v350 = vld [vmem:[%s3 + $0xc0] sm:$0xff]
    %v351 = vld [vmem:[%s3 + $0xc8] sm:$0xff]
    %v352 = vld [vmem:[%s3 + $0xd0] sm:$0xff]
    %v353 = vld [vmem:[%s3 + $0xd8] sm:$0xff]
    %v354 = vld [vmem:[%s3 + $0xe0] sm:$0xff]
    %v355 = vld [vmem:[%s3 + $0xe8] sm:$0xff]
    %v356 = vld [vmem:[%s3 + $0xf0] sm:$0xff]
    %v357 = vld [vmem:[%s3 + $0xf8] sm:$0xff]
    %v358 = vld [vmem:[%s3 + $0x100] sm:$0xff]
    %v359 = vld [vmem:[%s3 + $0x108] sm:$0xff]
    %v360 = vld [vmem:[%s3 + $0x110] sm:$0xff]
    %v361 = vld [vmem:[%s3 + $0x118] sm:$0xff]
    %v362 = vld [vmem:[%s3 + $0x120] sm:$0xff]
    %v363 = vld [vmem:[%s3 + $0x128] sm:$0xff]
    %v364 = vld [vmem:[%s3 + $0x130] sm:$0xff]
    %v365 = vld [vmem:[%s3 + $0x138] sm:$0xff]
    %v366 = vld [vmem:[%s3 + $0x140] sm:$0xff]
    %v367 = vld [vmem:[%s3 + $0x148] sm:$0xff]
    %v368 = vld [vmem:[%s3 + $0x150] sm:$0xff]
    %v369 = vld [vmem:[%s3 + $0x158] sm:$0xff]
    %v370 = vld [vmem:[%s3 + $0x160] sm:$0xff]
    %v371 = vld [vmem:[%s3 + $0x168] sm:$0xff]
    %v372 = vld [vmem:[%s3 + $0x170] sm:$0xff]
    %v373 = vld [vmem:[%s3 + $0x178] sm:$0xff]
    %v374 = vld [vmem:[%s3 + $0x180] sm:$0xff]
    %v375 = vld [vmem:[%s3 + $0x188] sm:$0xff]
    %v376 = vld [vmem:[%s3 + $0x190] sm:$0xff]
    %v377 = vld [vmem:[%s3 + $0x198] sm:$0xff]
    %v378 = vld [vmem:[%s3 + $0x1a0] sm:$0xff]
    %v379 = vld [vmem:[%s3 + $0x1a8] sm:$0xff]
    %v380 = vld [vmem:[%s3 + $0x1b0] sm:$0xff]
    %v381 = vld [vmem:[%s3 + $0x1b8] sm:$0xff]
    %v382 = vld [vmem:[%s3 + $0x1c0] sm:$0xff]
    %v383 = vld [vmem:[%s3 + $0x1c8] sm:$0xff]
    %v384 = vld [vmem:[%s3 + $0x1d0] sm:$0xff]
    %v385 = vld [vmem:[%s3 + $0x1d8] sm:$0xff]
    %v386 = vld [vmem:[%s3 + $0x1e0] sm:$0xff]
    %v387 = vld [vmem:[%s3 + $0x1e8] sm:$0xff]
    %v388 = vld [vmem:[%s3 + $0x1f0] sm:$0xff]
    %v389 = vld [vmem:[%s3 + $0x1f8] sm:$0xff]
    %390 = vmatpush.msra.mxu0 %v341
    %391 = vmatpush.msra.mxu0 %v340
    %392 = vmatpush.msra.mxu0 %v339
    %393 = vmatpush.msra.mxu0 %v338
    %394 = vmatpush.msra.mxu0 %v337
    %395 = vmatpush.msra.mxu0 %v336
    %396 = vmatpush.msra.mxu0 %v335
    %397 = vmatpush.msra.mxu0 %v334
    %398 = vmatpush.msra.mxu0 %v333
    %399 = vmatpush.msra.mxu0 %v332
    %400 = vmatpush.msra.mxu0 %v331
    %401 = vmatpush.msra.mxu0 %v330
    %402 = vmatpush.msra.mxu0 %v329
    %403 = vmatpush.msra.mxu0 %v328
    %404 = vmatpush.msra.mxu0 %v327
    %405 = vmatpush.msra.mxu0 %v326
    %406 = vmatmul.f32.gmra.mxu0 %v294
    %v407 = vpop.f32.mrf.mxu0
    %v408 = vadd.f32 0.0, %v407
    %409 = vmatmul.f32.gmra.mxu0 %v298
    %v410 = vpop.f32.mrf.mxu0
    %v411 = vadd.f32 0.0, %v410
    %412 = vmatmul.f32.gmra.mxu0 %v302
    %v413 = vpop.f32.mrf.mxu0
    %v414 = vadd.f32 0.0, %v413
    %415 = vmatmul.f32.gmra.mxu0 %v306
    %v416 = vpop.f32.mrf.mxu0
    %v417 = vadd.f32 0.0, %v416
    %418 = vdwg.mxu0
    %419 = vmatpush.msra.mxu0 %v357
    %420 = vmatpush.msra.mxu0 %v356
    %421 = vmatpush.msra.mxu0 %v355
    %422 = vmatpush.msra.mxu0 %v354
    %423 = vmatpush.msra.mxu0 %v353
    %424 = vmatpush.msra.mxu0 %v352
    %425 = vmatpush.msra.mxu0 %v351
    %426 = vmatpush.msra.mxu0 %v350
    %427 = vmatpush.msra.mxu0 %v349
    %428 = vmatpush.msra.mxu0 %v348
    %429 = vmatpush.msra.mxu0 %v347
    %430 = vmatpush.msra.mxu0 %v346
    %431 = vmatpush.msra.mxu0 %v345
    %432 = vmatpush.msra.mxu0 %v344
    %433 = vmatpush.msra.mxu0 %v343
    %434 = vmatpush.msra.mxu0 %v342
    %435 = vmatmul.f32.gmra.mxu0 %v295
    %v436 = vpop.f32.mrf.mxu0
    %v437 = vadd.f32 %v408, %v436
    %438 = vmatmul.f32.gmra.mxu0 %v299
    %v439 = vpop.f32.mrf.mxu0
    %v440 = vadd.f32 %v411, %v439
    %441 = vmatmul.f32.gmra.mxu0 %v303
    %v442 = vpop.f32.mrf.mxu0
    %v443 = vadd.f32 %v414, %v442
    %444 = vmatmul.f32.gmra.mxu0 %v307
    %v445 = vpop.f32.mrf.mxu0
    %v446 = vadd.f32 %v417, %v445
    %447 = vdwg.mxu0
    %448 = vmatpush.msra.mxu0 %v373
    %449 = vmatpush.msra.mxu0 %v372
    %450 = vmatpush.msra.mxu0 %v371
    %451 = vmatpush.msra.mxu0 %v370
    %452 = vmatpush.msra.mxu0 %v369
    %453 = vmatpush.msra.mxu0 %v368
    %454 = vmatpush.msra.mxu0 %v367
    %455 = vmatpush.msra.mxu0 %v366
    %456 = vmatpush.msra.mxu0 %v365
    %457 = vmatpush.msra.mxu0 %v364
    %458 = vmatpush.msra.mxu0 %v363
    %459 = vmatpush.msra.mxu0 %v362
    %460 = vmatpush.msra.mxu0 %v361
    %461 = vmatpush.msra.mxu0 %v360
    %462 = vmatpush.msra.mxu0 %v359
    %463 = vmatpush.msra.mxu0 %v358
    %464 = vmatmul.f32.gmra.mxu0 %v296
    %v465 = vpop.f32.mrf.mxu0
    %v466 = vadd.f32 %v437, %v465
    %467 = vmatmul.f32.gmra.mxu0 %v300
    %v468 = vpop.f32.mrf.mxu0
    %v469 = vadd.f32 %v440, %v468
    %470 = vmatmul.f32.gmra.mxu0 %v304
    %v471 = vpop.f32.mrf.mxu0
    %v472 = vadd.f32 %v443, %v471
    %473 = vmatmul.f32.gmra.mxu0 %v308
    %v474 = vpop.f32.mrf.mxu0
    %v475 = vadd.f32 %v446, %v474
    %476 = vdwg.mxu0
    %477 = vmatpush.msra.mxu0 %v389
    %478 = vmatpush.msra.mxu0 %v388
    %479 = vmatpush.msra.mxu0 %v387
    %480 = vmatpush.msra.mxu0 %v386
    %481 = vmatpush.msra.mxu0 %v385
    %482 = vmatpush.msra.mxu0 %v384
    %483 = vmatpush.msra.mxu0 %v383
    %484 = vmatpush.msra.mxu0 %v382
    %485 = vmatpush.msra.mxu0 %v381
    %486 = vmatpush.msra.mxu0 %v380
    %487 = vmatpush.msra.mxu0 %v379
    %488 = vmatpush.msra.mxu0 %v378
    %489 = vmatpush.msra.mxu0 %v377
    %490 = vmatpush.msra.mxu0 %v376
    %491 = vmatpush.msra.mxu0 %v375
    %492 = vmatpush.msra.mxu0 %v374
    %493 = vmatmul.f32.gmra.mxu0 %v297
    %v494 = vpop.f32.mrf.mxu0
    %v495 = vadd.f32 %v466, %v494
    %496 = vmatmul.f32.gmra.mxu0 %v301
    %v497 = vpop.f32.mrf.mxu0
    %v498 = vadd.f32 %v469, %v497
    %499 = vmatmul.f32.gmra.mxu0 %v305
    %v500 = vpop.f32.mrf.mxu0
    %v501 = vadd.f32 %v472, %v500
    %502 = vmatmul.f32.gmra.mxu0 %v309
    %v503 = vpop.f32.mrf.mxu0
    %v504 = vadd.f32 %v475, %v503
    %505 = vdwg.mxu0
    %v506 = vld [vmem:[%s7] sm:$0xff]
    %v507 = vld [vmem:[%s7 + $0x8] sm:$0xff]
    %v508 = vld [vmem:[%s7 + $0x10] sm:$0xff]
    %v509 = vld [vmem:[%s7 + $0x18] sm:$0xff]
    %v510 = vld [vmem:[%s8] sm:$0xff]
    %v511 = vld [vmem:[%s8 + $0x8] sm:$0xff]
    %v512 = vld [vmem:[%s8 + $0x10] sm:$0xff]
    %v513 = vld [vmem:[%s8 + $0x18] sm:$0xff]
    %515 = vset.pattern.permute.xlu0 0
    %516 = vperm.xlu0 %515, %v510
    %v517 = vpop.permute.xlu0 %516
    %520 = vset.pattern.permute.xlu0 0
    %521 = vperm.xlu0 %520, %v511
    %v522 = vpop.permute.xlu0 %521
    %525 = vset.pattern.permute.xlu0 0
    %526 = vperm.xlu0 %525, %v512
    %v527 = vpop.permute.xlu0 %526
    %530 = vset.pattern.permute.xlu0 0
    %531 = vperm.xlu0 %530, %v513
    %v532 = vpop.permute.xlu0 %531
    %vm534 = vcmask 261120
    %v536 = vsel %vm534, %v506, 0
    %v539 = vsel %vm534, %v507, 0
    %v542 = vsel %vm534, %v508, 0
    %v545 = vsel %vm534, %v509, 0
    %547 = vmatpush.msra.mxu0 0.0
    %548 = vmatpush.msra.mxu0 0.0
    %549 = vmatpush.msra.mxu0 0.0
    %550 = vmatpush.msra.mxu0 0.0
    %551 = vmatpush.msra.mxu0 0.0
    %552 = vmatpush.msra.mxu0 0.0
    %553 = vmatpush.msra.mxu0 0.0
    %554 = vmatpush.msra.mxu0 0.0
    %555 = vmatpush.msra.mxu0 0.0
    %556 = vmatpush.msra.mxu0 0.0
    %557 = vmatpush.msra.mxu0 0.0
    %558 = vmatpush.msra.mxu0 0.0
    %559 = vmatpush.msra.mxu0 %v504
    %560 = vmatpush.msra.mxu0 %v501
    %561 = vmatpush.msra.mxu0 %v498
    %562 = vmatpush.msra.mxu0 %v495
    %563 = vmatmul.f32.gmra.mxu0 %v536
    %v564 = vpop.f32.mrf.mxu0
    %v565 = vadd.f32 %v517, %v564
    %566 = vmatmul.f32.gmra.mxu0 %v539
    %v567 = vpop.f32.mrf.mxu0
    %v568 = vadd.f32 %v522, %v567
    %569 = vmatmul.f32.gmra.mxu0 %v542
    %v570 = vpop.f32.mrf.mxu0
    %v571 = vadd.f32 %v527, %v570
    %572 = vmatmul.f32.gmra.mxu0 %v545
    %v573 = vpop.f32.mrf.mxu0
    %v574 = vadd.f32 %v532, %v573
    %575 = vdwg.mxu0
    %v576 = vld [vmem:[%s2] sm:$0xff]
    %v577 = vld [vmem:[%s1] sm:$0xff]
    %v578 = vld [vmem:[%s1 + $0x8] sm:$0xff]
    %v579 = vld [vmem:[%s1 + $0x10] sm:$0xff]
    %v580 = vld [vmem:[%s1 + $0x18] sm:$0xff]
    %v581 = vmul.f32 %v565, %v577
    %v582 = vmul.f32 %v568, %v578
    %v583 = vmul.f32 %v571, %v579
    %v584 = vmul.f32 %v574, %v580
    %v586 = vsel %vm534, %v576, 0
    %588 = vmatpush.msra.mxu0 0.0
    %589 = vmatpush.msra.mxu0 0.0
    %590 = vmatpush.msra.mxu0 0.0
    %591 = vmatpush.msra.mxu0 0.0
    %592 = vmatpush.msra.mxu0 0.0
    %593 = vmatpush.msra.mxu0 0.0
    %594 = vmatpush.msra.mxu0 0.0
    %595 = vmatpush.msra.mxu0 0.0
    %596 = vmatpush.msra.mxu0 0.0
    %597 = vmatpush.msra.mxu0 0.0
    %598 = vmatpush.msra.mxu0 0.0
    %599 = vmatpush.msra.mxu0 0.0
    %600 = vmatpush.msra.mxu0 %v584
    %601 = vmatpush.msra.mxu0 %v583
    %602 = vmatpush.msra.mxu0 %v582
    %603 = vmatpush.msra.mxu0 %v581
    %604 = vmatmul.f32.gmra.mxu0 %v586
    %v605 = vpop.f32.mrf.mxu0
    %v606 = vadd.f32 0.0, %v605
    %607 = vdwg.mxu0
    %v608 = vld [vmem:[%s9] sm:$0xff]
    %v609 = vld [vmem:[%s9 + $0x8] sm:$0xff]
    %v610 = vld [vmem:[%s9 + $0x10] sm:$0xff]
    %v611 = vld [vmem:[%s9 + $0x18] sm:$0xff]
    %v612 = vld [vmem:[%s9 + $0x20] sm:$0xff]
    %v613 = vld [vmem:[%s9 + $0x28] sm:$0xff]
    %v614 = vld [vmem:[%s9 + $0x30] sm:$0xff]
    %v615 = vld [vmem:[%s9 + $0x38] sm:$0xff]
    %v616 = vld [vmem:[%s10] sm:$0xff]
    %v617 = vld [vmem:[%s10 + $0x8] sm:$0xff]
    %v618 = vld [vmem:[%s10 + $0x10] sm:$0xff]
    %v619 = vld [vmem:[%s10 + $0x18] sm:$0xff]
    %v620 = vld [vmem:[%s10 + $0x20] sm:$0xff]
    %v621 = vld [vmem:[%s10 + $0x28] sm:$0xff]
    %v622 = vld [vmem:[%s10 + $0x30] sm:$0xff]
    %v623 = vld [vmem:[%s10 + $0x38] sm:$0xff]
    %625 = vset.pattern.permute.xlu0 0
    %626 = vperm.xlu0 %625, %v616
    %v627 = vpop.permute.xlu0 %626
    %630 = vset.pattern.permute.xlu0 0
    %631 = vperm.xlu0 %630, %v617
    %v632 = vpop.permute.xlu0 %631
    %635 = vset.pattern.permute.xlu0 0
    %636 = vperm.xlu0 %635, %v618
    %v637 = vpop.permute.xlu0 %636
    %640 = vset.pattern.permute.xlu0 0
    %641 = vperm.xlu0 %640, %v619
    %v642 = vpop.permute.xlu0 %641
    %645 = vset.pattern.permute.xlu0 0
    %646 = vperm.xlu0 %645, %v620
    %v647 = vpop.permute.xlu0 %646
    %650 = vset.pattern.permute.xlu0 0
    %651 = vperm.xlu0 %650, %v621
    %v652 = vpop.permute.xlu0 %651
    %655 = vset.pattern.permute.xlu0 0
    %656 = vperm.xlu0 %655, %v622
    %v657 = vpop.permute.xlu0 %656
    %660 = vset.pattern.permute.xlu0 0
    %661 = vperm.xlu0 %660, %v623
    %v662 = vpop.permute.xlu0 %661
    %v665 = vsel %vm105, %v608, 0
    %v668 = vsel %vm105, %v609, 0
    %v671 = vsel %vm105, %v610, 0
    %v674 = vsel %vm105, %v611, 0
    %v677 = vsel %vm105, %v612, 0
    %v680 = vsel %vm105, %v613, 0
    %v683 = vsel %vm105, %v614, 0
    %v686 = vsel %vm105, %v615, 0
    %688 = vmatpush.msra.mxu0 0.0
    %689 = vmatpush.msra.mxu0 0.0
    %690 = vmatpush.msra.mxu0 0.0
    %691 = vmatpush.msra.mxu0 0.0
    %692 = vmatpush.msra.mxu0 0.0
    %693 = vmatpush.msra.mxu0 0.0
    %694 = vmatpush.msra.mxu0 0.0
    %695 = vmatpush.msra.mxu0 0.0
    %696 = vmatpush.msra.mxu0 0.0
    %697 = vmatpush.msra.mxu0 0.0
    %698 = vmatpush.msra.mxu0 0.0
    %699 = vmatpush.msra.mxu0 0.0
    %700 = vmatpush.msra.mxu0 0.0
    %701 = vmatpush.msra.mxu0 0.0
    %702 = vmatpush.msra.mxu0 0.0
    %703 = vmatpush.msra.mxu0 %v606
    %704 = vmatmul.f32.gmra.mxu0 %v665
    %v705 = vpop.f32.mrf.mxu0
    %v706 = vadd.f32 %v627, %v705
    %707 = vmatmul.f32.gmra.mxu0 %v668
    %v708 = vpop.f32.mrf.mxu0
    %v709 = vadd.f32 %v632, %v708
    %710 = vmatmul.f32.gmra.mxu0 %v671
    %v711 = vpop.f32.mrf.mxu0
    %v712 = vadd.f32 %v637, %v711
    %713 = vmatmul.f32.gmra.mxu0 %v674
    %v714 = vpop.f32.mrf.mxu0
    %v715 = vadd.f32 %v642, %v714
    %716 = vmatmul.f32.gmra.mxu0 %v677
    %v717 = vpop.f32.mrf.mxu0
    %v718 = vadd.f32 %v647, %v717
    %719 = vmatmul.f32.gmra.mxu0 %v680
    %v720 = vpop.f32.mrf.mxu0
    %v721 = vadd.f32 %v652, %v720
    %722 = vmatmul.f32.gmra.mxu0 %v683
    %v723 = vpop.f32.mrf.mxu0
    %v724 = vadd.f32 %v657, %v723
    %725 = vmatmul.f32.gmra.mxu0 %v686
    %v726 = vpop.f32.mrf.mxu0
    %v727 = vadd.f32 %v662, %v726
    %728 = vdwg.mxu0
    %v729 = vld [vmem:[%s4] sm:$0xff]
    %731 = vst [vmem:[#allocation1] ss:$4 sm:$0xff] %v729
    %v732 = vld.sshfl [vmem:[#allocation1] sm:$0xff pattern:$0x73625140]
    %v733 = vld.sshfl [vmem:[#allocation1 + $0x8] sm:$0xff pattern:$0x73625140]
    %v734 = vld.sshfl [vmem:[#allocation1 + $0x10] sm:$0xff pattern:$0x73625140]
    %v735 = vld.sshfl [vmem:[#allocation1 + $0x18] sm:$0xff pattern:$0x73625140]
    %vm736 = vcmask 15360
    %v738 = vsel %vm736, %v706, 0
    %v741 = vsel %vm736, %v709, 0
    %v744 = vsel %vm736, %v712, 0
    %v747 = vsel %vm736, %v715, 0
    %v750 = vsel %vm736, %v718, 0
    %v753 = vsel %vm736, %v721, 0
    %v756 = vsel %vm736, %v724, 0
    %v759 = vsel %vm736, %v727, 0
    %vm761 = vcmask 1041408
    %v762 = vsel %vm761, %v732, 0
    %v764 = vsel %vm761, %v733, 0
    %v766 = vsel %vm761, %v734, 0
    %v768 = vsel %vm761, %v735, 0
    %770 = vmatpush.msra.mxu0 0.0
    %771 = vmatpush.msra.mxu0 0.0
    %772 = vmatpush.msra.mxu0 0.0
    %773 = vmatpush.msra.mxu0 0.0
    %774 = vmatpush.msra.mxu0 0.0
    %775 = vmatpush.msra.mxu0 0.0
    %776 = vmatpush.msra.mxu0 0.0
    %777 = vmatpush.msra.mxu0 0.0
    %778 = vmatpush.msra.mxu0 0.0
    %779 = vmatpush.msra.mxu0 0.0
    %780 = vmatpush.msra.mxu0 0.0
    %781 = vmatpush.msra.mxu0 0.0
    %782 = vmatpush.msra.mxu0 0.0
    %783 = vmatpush.msra.mxu0 0.0
    %784 = vmatpush.msra.mxu0 0.0
    %785 = vmatpush.msra.mxu0 %v762
    %786 = vmatmul.f32.gmra.mxu0 %v738
    %v787 = vpop.f32.mrf.mxu0
    %v788 = vadd.f32 0.0, %v787
    %789 = vmatmul.f32.gmra.mxu0 %v741
    %v790 = vpop.f32.mrf.mxu0
    %v791 = vadd.f32 0.0, %v790
    %792 = vmatmul.f32.gmra.mxu0 %v744
    %v793 = vpop.f32.mrf.mxu0
    %v794 = vadd.f32 0.0, %v793
    %795 = vmatmul.f32.gmra.mxu0 %v747
    %v796 = vpop.f32.mrf.mxu0
    %v797 = vadd.f32 0.0, %v796
    %798 = vmatmul.f32.gmra.mxu0 %v750
    %v799 = vpop.f32.mrf.mxu0
    %v800 = vadd.f32 0.0, %v799
    %801 = vmatmul.f32.gmra.mxu0 %v753
    %v802 = vpop.f32.mrf.mxu0
    %v803 = vadd.f32 0.0, %v802
    %804 = vmatmul.f32.gmra.mxu0 %v756
    %v805 = vpop.f32.mrf.mxu0
    %v806 = vadd.f32 0.0, %v805
    %807 = vmatmul.f32.gmra.mxu0 %v759
    %v808 = vpop.f32.mrf.mxu0
    %v809 = vadd.f32 0.0, %v808
    %810 = vdwg.mxu0
    %811 = vmatpush.msra.mxu0 0.0
    %812 = vmatpush.msra.mxu0 0.0
    %813 = vmatpush.msra.mxu0 0.0
    %814 = vmatpush.msra.mxu0 0.0
    %815 = vmatpush.msra.mxu0 0.0
    %816 = vmatpush.msra.mxu0 0.0
    %817 = vmatpush.msra.mxu0 0.0
    %818 = vmatpush.msra.mxu0 0.0
    %819 = vmatpush.msra.mxu0 0.0
    %820 = vmatpush.msra.mxu0 0.0
    %821 = vmatpush.msra.mxu0 0.0
    %822 = vmatpush.msra.mxu0 0.0
    %823 = vmatpush.msra.mxu0 0.0
    %824 = vmatpush.msra.mxu0 0.0
    %825 = vmatpush.msra.mxu0 0.0
    %826 = vmatpush.msra.mxu0 %v764
    %827 = vmatmul.f32.gmra.mxu0 %v738
    %v828 = vpop.f32.mrf.mxu0
    %v829 = vadd.f32 0.0, %v828
    %830 = vmatmul.f32.gmra.mxu0 %v741
    %v831 = vpop.f32.mrf.mxu0
    %v832 = vadd.f32 0.0, %v831
    %833 = vmatmul.f32.gmra.mxu0 %v744
    %v834 = vpop.f32.mrf.mxu0
    %v835 = vadd.f32 0.0, %v834
    %836 = vmatmul.f32.gmra.mxu0 %v747
    %v837 = vpop.f32.mrf.mxu0
    %v838 = vadd.f32 0.0, %v837
    %839 = vmatmul.f32.gmra.mxu0 %v750
    %v840 = vpop.f32.mrf.mxu0
    %v841 = vadd.f32 0.0, %v840
    %842 = vmatmul.f32.gmra.mxu0 %v753
    %v843 = vpop.f32.mrf.mxu0
    %v844 = vadd.f32 0.0, %v843
    %845 = vmatmul.f32.gmra.mxu0 %v756
    %v846 = vpop.f32.mrf.mxu0
    %v847 = vadd.f32 0.0, %v846
    %848 = vmatmul.f32.gmra.mxu0 %v759
    %v849 = vpop.f32.mrf.mxu0
    %v850 = vadd.f32 0.0, %v849
    %851 = vdwg.mxu0
    %852 = vmatpush.msra.mxu0 0.0
    %853 = vmatpush.msra.mxu0 0.0
    %854 = vmatpush.msra.mxu0 0.0
    %855 = vmatpush.msra.mxu0 0.0
    %856 = vmatpush.msra.mxu0 0.0
    %857 = vmatpush.msra.mxu0 0.0
    %858 = vmatpush.msra.mxu0 0.0
    %859 = vmatpush.msra.mxu0 0.0
    %860 = vmatpush.msra.mxu0 0.0
    %861 = vmatpush.msra.mxu0 0.0
    %862 = vmatpush.msra.mxu0 0.0
    %863 = vmatpush.msra.mxu0 0.0
    %864 = vmatpush.msra.mxu0 0.0
    %865 = vmatpush.msra.mxu0 0.0
    %866 = vmatpush.msra.mxu0 0.0
    %867 = vmatpush.msra.mxu0 %v766
    %868 = vmatmul.f32.gmra.mxu0 %v738
    %v869 = vpop.f32.mrf.mxu0
    %v870 = vadd.f32 0.0, %v869
    %871 = vmatmul.f32.gmra.mxu0 %v741
    %v872 = vpop.f32.mrf.mxu0
    %v873 = vadd.f32 0.0, %v872
    %874 = vmatmul.f32.gmra.mxu0 %v744
    %v875 = vpop.f32.mrf.mxu0
    %v876 = vadd.f32 0.0, %v875
    %877 = vmatmul.f32.gmra.mxu0 %v747
    %v878 = vpop.f32.mrf.mxu0
    %v879 = vadd.f32 0.0, %v878
    %880 = vmatmul.f32.gmra.mxu0 %v750
    %v881 = vpop.f32.mrf.mxu0
    %v882 = vadd.f32 0.0, %v881
    %883 = vmatmul.f32.gmra.mxu0 %v753
    %v884 = vpop.f32.mrf.mxu0
    %v885 = vadd.f32 0.0, %v884
    %886 = vmatmul.f32.gmra.mxu0 %v756
    %v887 = vpop.f32.mrf.mxu0
    %v888 = vadd.f32 0.0, %v887
    %889 = vmatmul.f32.gmra.mxu0 %v759
    %v890 = vpop.f32.mrf.mxu0
    %v891 = vadd.f32 0.0, %v890
    %892 = vdwg.mxu0
    %893 = vmatpush.msra.mxu0 0.0
    %894 = vmatpush.msra.mxu0 0.0
    %895 = vmatpush.msra.mxu0 0.0
    %896 = vmatpush.msra.mxu0 0.0
    %897 = vmatpush.msra.mxu0 0.0
    %898 = vmatpush.msra.mxu0 0.0
    %899 = vmatpush.msra.mxu0 0.0
    %900 = vmatpush.msra.mxu0 0.0
    %901 = vmatpush.msra.mxu0 0.0
    %902 = vmatpush.msra.mxu0 0.0
    %903 = vmatpush.msra.mxu0 0.0
    %904 = vmatpush.msra.mxu0 0.0
    %905 = vmatpush.msra.mxu0 0.0
    %906 = vmatpush.msra.mxu0 0.0
    %907 = vmatpush.msra.mxu0 0.0
    %908 = vmatpush.msra.mxu0 %v768
    %909 = vmatmul.f32.gmra.mxu0 %v738
    %v910 = vpop.f32.mrf.mxu0
    %v911 = vadd.f32 0.0, %v910
    %912 = vmatmul.f32.gmra.mxu0 %v741
    %v913 = vpop.f32.mrf.mxu0
    %v914 = vadd.f32 0.0, %v913
    %915 = vmatmul.f32.gmra.mxu0 %v744
    %v916 = vpop.f32.mrf.mxu0
    %v917 = vadd.f32 0.0, %v916
    %918 = vmatmul.f32.gmra.mxu0 %v747
    %v919 = vpop.f32.mrf.mxu0
    %v920 = vadd.f32 0.0, %v919
    %921 = vmatmul.f32.gmra.mxu0 %v750
    %v922 = vpop.f32.mrf.mxu0
    %v923 = vadd.f32 0.0, %v922
    %924 = vmatmul.f32.gmra.mxu0 %v753
    %v925 = vpop.f32.mrf.mxu0
    %v926 = vadd.f32 0.0, %v925
    %927 = vmatmul.f32.gmra.mxu0 %v756
    %v928 = vpop.f32.mrf.mxu0
    %v929 = vadd.f32 0.0, %v928
    %930 = vmatmul.f32.gmra.mxu0 %v759
    %v931 = vpop.f32.mrf.mxu0
    %v932 = vadd.f32 0.0, %v931
    %933 = vdwg.mxu0
    %v934 = vadd.f32 %v788, 1.0
    %v935 = vadd.f32 %v829, 1.0
    %v936 = vadd.f32 %v870, 1.0
    %v937 = vadd.f32 %v911, 1.0
    %v938 = vadd.f32 %v791, 1.0
    %v939 = vadd.f32 %v832, 1.0
    %v940 = vadd.f32 %v873, 1.0
    %v941 = vadd.f32 %v914, 1.0
    %v942 = vadd.f32 %v794, 1.0
    %v943 = vadd.f32 %v835, 1.0
    %v944 = vadd.f32 %v876, 1.0
    %v945 = vadd.f32 %v917, 1.0
    %v946 = vadd.f32 %v797, 1.0
    %v947 = vadd.f32 %v838, 1.0
    %v948 = vadd.f32 %v879, 1.0
    %v949 = vadd.f32 %v920, 1.0
    %v950 = vmul.f32 %v310, %v934
    %v951 = vmul.f32 %v311, %v935
    %v952 = vmul.f32 %v312, %v936
    %v953 = vmul.f32 %v313, %v937
    %v954 = vmul.f32 %v314, %v938
    %v955 = vmul.f32 %v315, %v939
    %v956 = vmul.f32 %v316, %v940
    %v957 = vmul.f32 %v317, %v941
    %v958 = vmul.f32 %v318, %v942
    %v959 = vmul.f32 %v319, %v943
    %v960 = vmul.f32 %v320, %v944
    %v961 = vmul.f32 %v321, %v945
    %v962 = vmul.f32 %v322, %v946
    %v963 = vmul.f32 %v323, %v947
    %v964 = vmul.f32 %v324, %v948
    %v965 = vmul.f32 %v325, %v949
    %v966 = vadd.f32 %v950, %v800
    %v967 = vadd.f32 %v951, %v841
    %v968 = vadd.f32 %v952, %v882
    %v969 = vadd.f32 %v953, %v923
    %v970 = vadd.f32 %v954, %v803
    %v971 = vadd.f32 %v955, %v844
    %v972 = vadd.f32 %v956, %v885
    %v973 = vadd.f32 %v957, %v926
    %v974 = vadd.f32 %v958, %v806
    %v975 = vadd.f32 %v959, %v847
    %v976 = vadd.f32 %v960, %v888
    %v977 = vadd.f32 %v961, %v929
    %v978 = vadd.f32 %v962, %v809
    %v979 = vadd.f32 %v963, %v850
    %v980 = vadd.f32 %v964, %v891
    %v981 = vadd.f32 %v965, %v932
    %v982 = vld [vmem:[%s11] sm:$0xf]
    %v983 = vld [vmem:[%s12] sm:$0xf]
    %985 = vset.pattern.permute.xlu0 0
    %986 = vperm.xlu0 %985, %v983
    %v987 = vpop.permute.xlu0 %986
    %v990 = vsel %vm534, %v982, 0
    %992 = vmatpush.msra.mxu0 0.0
    %993 = vmatpush.msra.mxu0 0.0
    %994 = vmatpush.msra.mxu0 0.0
    %995 = vmatpush.msra.mxu0 0.0
    %996 = vmatpush.msra.mxu0 0.0
    %997 = vmatpush.msra.mxu0 0.0
    %998 = vmatpush.msra.mxu0 0.0
    %999 = vmatpush.msra.mxu0 0.0
    %1000 = vmatpush.msra.mxu0 0.0
    %1001 = vmatpush.msra.mxu0 0.0
    %1002 = vmatpush.msra.mxu0 0.0
    %1003 = vmatpush.msra.mxu0 0.0
    %1004 = vmatpush.msra.mxu0 %v978
    %1005 = vmatpush.msra.mxu0 %v974
    %1006 = vmatpush.msra.mxu0 %v970
    %1007 = vmatpush.msra.mxu0 %v966
    %1008 = vmatmul.f32.gmra.mxu0 %v990
    %v1009 = vpop.f32.mrf.mxu0
    %v1010 = vadd.f32 %v987, %v1009
    %1011 = vdwg.mxu0
    %1012 = vmatpush.msra.mxu0 0.0
    %1013 = vmatpush.msra.mxu0 0.0
    %1014 = vmatpush.msra.mxu0 0.0
    %1015 = vmatpush.msra.mxu0 0.0
    %1016 = vmatpush.msra.mxu0 0.0
    %1017 = vmatpush.msra.mxu0 0.0
    %1018 = vmatpush.msra.mxu0 0.0
    %1019 = vmatpush.msra.mxu0 0.0
    %1020 = vmatpush.msra.mxu0 0.0
    %1021 = vmatpush.msra.mxu0 0.0
    %1022 = vmatpush.msra.mxu0 0.0
    %1023 = vmatpush.msra.mxu0 0.0
    %1024 = vmatpush.msra.mxu0 %v979
    %1025 = vmatpush.msra.mxu0 %v975
    %1026 = vmatpush.msra.mxu0 %v971
    %1027 = vmatpush.msra.mxu0 %v967
    %1028 = vmatmul.f32.gmra.mxu0 %v990
    %v1029 = vpop.f32.mrf.mxu0
    %v1030 = vadd.f32 %v987, %v1029
    %1031 = vdwg.mxu0
    %1032 = vmatpush.msra.mxu0 0.0
    %1033 = vmatpush.msra.mxu0 0.0
    %1034 = vmatpush.msra.mxu0 0.0
    %1035 = vmatpush.msra.mxu0 0.0
    %1036 = vmatpush.msra.mxu0 0.0
    %1037 = vmatpush.msra.mxu0 0.0
    %1038 = vmatpush.msra.mxu0 0.0
    %1039 = vmatpush.msra.mxu0 0.0
    %1040 = vmatpush.msra.mxu0 0.0
    %1041 = vmatpush.msra.mxu0 0.0
    %1042 = vmatpush.msra.mxu0 0.0
    %1043 = vmatpush.msra.mxu0 0.0
    %1044 = vmatpush.msra.mxu0 %v980
    %1045 = vmatpush.msra.mxu0 %v976
    %1046 = vmatpush.msra.mxu0 %v972
    %1047 = vmatpush.msra.mxu0 %v968
    %1048 = vmatmul.f32.gmra.mxu0 %v990
    %v1049 = vpop.f32.mrf.mxu0
    %v1050 = vadd.f32 %v987, %v1049
    %1051 = vdwg.mxu0
    %1052 = vmatpush.msra.mxu0 0.0
    %1053 = vmatpush.msra.mxu0 0.0
    %1054 = vmatpush.msra.mxu0 0.0
    %1055 = vmatpush.msra.mxu0 0.0
    %1056 = vmatpush.msra.mxu0 0.0
    %1057 = vmatpush.msra.mxu0 0.0
    %1058 = vmatpush.msra.mxu0 0.0
    %1059 = vmatpush.msra.mxu0 0.0
    %1060 = vmatpush.msra.mxu0 0.0
    %1061 = vmatpush.msra.mxu0 0.0
    %1062 = vmatpush.msra.mxu0 0.0
    %1063 = vmatpush.msra.mxu0 0.0
    %1064 = vmatpush.msra.mxu0 %v981
    %1065 = vmatpush.msra.mxu0 %v977
    %1066 = vmatpush.msra.mxu0 %v973
    %1067 = vmatpush.msra.mxu0 %v969
    %1068 = vmatmul.f32.gmra.mxu0 %v990
    %v1069 = vpop.f32.mrf.mxu0
    %v1070 = vadd.f32 %v987, %v1069
    %1071 = vdwg.mxu0
    %v1072 = vsub.f32 %v45, %v1010
    %v1073 = vsub.f32 %v46, %v1030
    %v1074 = vsub.f32 %v47, %v1050
    %v1075 = vsub.f32 %v48, %v1070
    %v1076 = vand.u32 2147483647, %v1072
    %v1077 = vand.u32 2147483647, %v1073
    %v1078 = vand.u32 2147483647, %v1074
    %v1079 = vand.u32 2147483647, %v1075
    %vm1080 = vcmask 1043456
    %v1081 = vsel %vm1080, %v1076, 0.0
    %v1082 = vsel %vm1080, %v1077, 0.0
    %v1083 = vadd.f32 %v1081, %v1082
    %v1084 = vsel %vm1080, %v1078, 0.0
    %v1085 = vadd.f32 %v1083, %v1084
    %v1086 = vsel %vm1080, %v1079, 0.0
    %v1087 = vadd.f32 %v1085, %v1086
    %1088 = vadd.xlane.f32.xlu0 %v1087
    %v1089 = vpop.xlane.xlu0 %1088
    %v1090 = vrot.slane %v1089, 4
    %v1091 = vadd.f32 %v1089, %v1090
    %v1092 = vrot.slane %v1091, 2
    %v1093 = vadd.f32 %v1091, %v1092
    %v1094 = vrot.slane %v1093, 1
    %v1095 = vadd.f32 %v1093, %v1094
    %s1096 = vtos %v1095
    %v1097 = vrcp.pop 2048.0
    %v1098 = vmul.f32 2048.0, %v1097
    %v1099 = vsub.f32 1.0, %v1098
    %v1100 = vmul.f32 %v1097, %v1099
    %v1101 = vadd.f32 %v1097, %v1100
    %vm1102 = vweird.f32 %v1097
    %v1103 = vsel %vm1102, %v1097, %v1101
    %s1104 = vtos %v1103
    %s1105 = smul.f32 %s1096, %s1104
    %s1106 = scalar_lea.smem [#allocation2], 0
    %1107 = sst [smem:[%s1106]] %s1105
    // Predicated region
    $region54: #{cycle_consistency_loss.1} parent=1 // pred_check
      _
    $region55: #{cycle_consistency_loss.1} parent=1 // pred_check_branch
      %1109 = sbr.rel (0) target = $region57
    $region56: #{cycle_consistency_loss.1} parent=1 // pred_region
      %1111 = vsyncadd [#allocation3], 0
      %s1113 = sshll.u32 %s13, 4
      %s1114 = int_to_ptr.hbm [resolvable:$true] %s1113
      %1116 = dma.smem_to_hbm [#allocation2], 16, %s1114, [#allocation3]
    $region57: #{cycle_consistency_loss.1} parent=1 // pred_fallthru
      _
    // Predicated region
    $region58: #{cycle_consistency_loss.1} parent=1 // pred_check
      _
    $region59: #{cycle_consistency_loss.1} parent=1 // pred_check_branch
      %1118 = sbr.rel (0) target = $region61
    $region60: #{cycle_consistency_loss.1} parent=1 // pred_region
      %1120 = dma.done [#allocation3], 16
    $region61: #{cycle_consistency_loss.1} parent=1 // pred_fallthru
      _
    %1121 = sfence
    %1122 = vsyncpa [#allocation3], 1

</llo_original>
